<compile_context>
chip_gen: v7x
topology: tpu7x:2x2x1
jax: 0.10.0
libtpu: 0.0.40
codegen_flags: <defaults>
</compile_context>

<pallas_src>
import jax
import jax.numpy as jnp
from jax.experimental import pallas as pl
from jax.experimental.pallas import tpu as pltpu

EPS = 1e-5
_MIB = 1024 * 1024


def _round_up(x, m):
    return (x + m - 1) // m * m


def _sublane_quantum(itemsize):
    # sublane packing quantum per dtype width (f32: 8, bf16: 16, int8/fp8: 32)
    return {4: 8, 2: 16, 1: 32}.get(itemsize, 8)


def _budgets():
    """Generation-aware (target block bytes, scoped-VMEM limit, resident budget)."""
    try:
        cap = int(getattr(pltpu.get_tpu_info(), "vmem_capacity_bytes", 0) or 0)
    except Exception:
        cap = 0
    if cap >= 96 * _MIB:        # v5e / v6e: 128 MiB physical VMEM
        return 8 * _MIB, 80 * _MIB, 64 * _MIB
    if cap >= 48 * _MIB:        # v7x: 64 MiB physical VMEM, ~2.3x faster HBM
        return 6 * _MIB, 48 * _MIB, 28 * _MIB
    # Unknown generation: conservative, known-good settings.
    return 2 * _MIB, 32 * _MIB, 20 * _MIB


def _pick_tile_s(s, c_pad, itemsize, target_bytes, max_lanes=None):
    """Lane tile for the flattened spatial axis.  Returns (tile_s, lane_w)."""
    if s < 128:
        return s, s                       # single short block, lane width == S
    cap = max(128, (target_bytes // (c_pad * itemsize)) // 128 * 128)
    if max_lanes is not None:
        cap = min(cap, max_lanes)
    tile_s = min(_round_up(s, 128), cap)
    return tile_s, 128


# --------------------------------------------------------------------------
# Streaming two-pass kernels
# --------------------------------------------------------------------------
def _make_stats_kernel(c, tile_s, lane_w, s_total, need_mask):
    """Accumulate per-(batch, channel) lane-partial sum(x) and sum(x*x)."""
    n_chunks = tile_s // lane_w

    def kernel(x_ref, sum_ref, sumsq_ref):
        @pl.when(pl.program_id(1) == 0)
        def _():
            sum_ref[...] = jnp.zeros_like(sum_ref)
            sumsq_ref[...] = jnp.zeros_like(sumsq_ref)

        base = pl.program_id(1) * tile_s
        if need_mask:
            lane = jax.lax.broadcasted_iota(jnp.int32, (1, c, lane_w), 2)

        # Lane-wise partial accumulation: pure VALU adds into (1, C, lane_w)
        # partials (no per-tile cross-lane XLU reduce, no width-1 stores).
        ps = jnp.zeros((1, c, lane_w), jnp.float32)
        pq = jnp.zeros((1, c, lane_w), jnp.float32)
        for k in range(n_chunks):
            xk = x_ref[:, :, k * lane_w:(k + 1) * lane_w].astype(jnp.float32)
            if need_mask:  # zero the ragged-S tail before it enters the sums
                xk = jnp.where(lane < (s_total - (base + k * lane_w)), xk, 0.0)
            ps = ps + xk
            pq = pq + xk * xk
        sum_ref[...] += ps
        sumsq_ref[...] += pq

    return kernel


def _norm_relu_kernel(x_ref, scale_ref, shift_ref, o_ref):
    """y = max(x * scale + shift, 0) with per-channel scale/shift."""
    x = x_ref[...].astype(jnp.float32)                      # (1, C, TILE_S)
    y = x * scale_ref[...] + shift_ref[...]                 # bcast (1, C, 1)
    o_ref[...] = jnp.maximum(y, 0.0).astype(o_ref.dtype)
    # NOTE: the ragged-S tail of the last block is computed on garbage lanes
    # but Pallas clamps the output writeback to the array bounds.


# --------------------------------------------------------------------------
# Fully VMEM-resident single-read kernel (small / medium layers)
# --------------------------------------------------------------------------
def _make_fused_kernel(n, m, eps):
    def kernel(x_ref, gamma_ref, beta_ref, o_ref):
        x = x_ref[...].astype(jnp.float32)                  # (N, C, S)
        ps = jnp.sum(x, axis=2, keepdims=True)              # lane reduce -> (N, C, 1)
        tot = ps[0:1]
        for i in range(1, n):                               # static batch reduce
            tot = tot + ps[i:i + 1]
        mean = tot / m                                       # (1, C, 1)
        d = x - mean
        qs = jnp.sum(d * d, axis=2, keepdims=True)           # centered variance
        qtot = qs[0:1]
        for i in range(1, n):
            qtot = qtot + qs[i:i + 1]
        inv_std = jax.lax.rsqrt(qtot / m + eps)
        scale = gamma_ref[...] * inv_std                     # (1, C, 1)
        shift = beta_ref[...] - mean * scale
        o_ref[...] = jnp.maximum(x * scale + shift, 0.0).astype(o_ref.dtype)

    return kernel


# --------------------------------------------------------------------------
# Wrapper
# --------------------------------------------------------------------------
def bn_relu(x_nchw, gamma, beta, eps=EPS, force_streaming=False):
    """x_nchw: (N, C, H, W). gamma, beta: (C,). Training-mode BN + ReLU."""
    n, c, h, w = x_nchw.shape
    s = h * w
    x3 = x_nchw.reshape(n, c, s)          # pure reshape — no transpose traffic
    itemsize = jnp.dtype(x3.dtype).itemsize
    target_bytes, vmem_limit, resident_budget = _budgets()

    # Padded VMEM footprint estimate (sublane/lane tile padding included).
    c_pad = _round_up(c, _sublane_quantum(itemsize))
    s_pad = _round_up(s, 128)
    blk_bytes = n * c_pad * s_pad * itemsize
    f32_bytes = n * c_pad * s_pad * 4
    resident_need = 4 * blk_bytes + 3 * f32_bytes  # 2x-buffered in+out + f32 temps

    gamma_f = gamma.astype(jnp.float32).reshape(1, c, 1)
    beta_f = beta.astype(jnp.float32).reshape(1, c, 1)

    # ---- Single-read fused path: x is read from HBM exactly once. ----
    if (not force_streaming) and resident_need <= resident_budget:
        whole_spec = pl.BlockSpec((n, c, s), lambda i: (0, 0, 0))
        vec_spec = pl.BlockSpec((1, c, 1), lambda i: (0, 0, 0))
        out3 = pl.pallas_call(
            _make_fused_kernel(n, float(n * s), eps),
            out_shape=jax.ShapeDtypeStruct((n, c, s), x3.dtype),
            grid=(1,),
            in_specs=[whole_spec, vec_spec, vec_spec],
            out_specs=whole_spec,
            compiler_params=pltpu.CompilerParams(
                dimension_semantics=("arbitrary",),
                vmem_limit_bytes=vmem_limit),
        )(x3, gamma_f, beta_f)
        return out3.reshape(n, c, h, w)

    # ---- Streaming two-pass path. ----
    # Stats tile: cap the in-kernel chunk count to keep the unrolled body small.
    tile_stats, lane_w = _pick_tile_s(s, c_pad, itemsize, target_bytes,
                                      max_lanes=256 * 128)
    # Apply tile: no in-kernel loop, so use the full byte target.
    tile_apply, _ = _pick_tile_s(s, c_pad, itemsize, target_bytes)

    stats_steps = pl.cdiv(s, tile_stats)
    apply_steps = pl.cdiv(s, tile_apply)
    need_mask = (stats_steps * tile_stats != s)

    x_stats_spec = pl.BlockSpec((1, c, tile_stats), lambda ni, si: (ni, 0, si))
    acc_spec = pl.BlockSpec((1, c, lane_w), lambda ni, si: (ni, 0, 0))
    x_apply_spec = pl.BlockSpec((1, c, tile_apply), lambda ni, si: (ni, 0, si))
    vec_spec = pl.BlockSpec((1, c, 1), lambda ni, si: (0, 0, 0))

    # Pass 1: per-(batch, channel) lane-partial sum / sum-of-squares.  Batch
    # axis is "parallel" so both v7x TensorCores share the stats pass.
    sums, sumsqs = pl.pallas_call(
        _make_stats_kernel(c, tile_stats, lane_w, s, need_mask),
        out_shape=(jax.ShapeDtypeStruct((n, c, lane_w), jnp.float32),
                   jax.ShapeDtypeStruct((n, c, lane_w), jnp.float32)),
        grid=(n, stats_steps),
        in_specs=[x_stats_spec],
        out_specs=(acc_spec, acc_spec),
        compiler_params=pltpu.CompilerParams(
            dimension_semantics=("parallel", "arbitrary"),
            vmem_limit_bytes=vmem_limit),
    )(x3)

    # Tiny (N, C, lane_w)-sized finalize in plain JAX.  Biased variance (what
    # PyTorch uses to normalize in training mode), folded with gamma/beta into
    # one per-channel FMA (scale, shift).
    m = float(n * s)
    mean = jnp.sum(sums, axis=(0, 2)) / m
    var = jnp.maximum(jnp.sum(sumsqs, axis=(0, 2)) / m - mean * mean, 0.0)
    # NOTE: E[x^2] - mean^2 in f32 is fine for typical activations; the fused
    # resident path uses the centered form.  TODO(synk): Welford/centered
    # accumulation for the streaming path if |mean| >> std.
    inv_std = jax.lax.rsqrt(var + eps)
    scale = gamma.astype(jnp.float32) * inv_std
    shift = beta.astype(jnp.float32) - mean * scale

    # Pass 2: stream x, apply FMA + ReLU (independent lane-dense tiles).
    out3 = pl.pallas_call(
        _norm_relu_kernel,
        out_shape=jax.ShapeDtypeStruct((n, c, s), x3.dtype),
        grid=(n, apply_steps),
        in_specs=[x_apply_spec, vec_spec, vec_spec],
        out_specs=x_apply_spec,
        compiler_params=pltpu.CompilerParams(
            dimension_semantics=("parallel", "parallel"),
            vmem_limit_bytes=vmem_limit),
    )(x3, scale.reshape(1, c, 1), shift.reshape(1, c, 1))

    return out3.reshape(n, c, h, w)


if __name__ == "__main__":
    key = jax.random.PRNGKey(0)
    N, C, H, W = 2, 4, 16, 16
    x = jax.random.normal(key, (N, C, H, W), dtype=jnp.float32)

    # Deterministic params per nn.BatchNorm2d.__init__: weight=1, bias=0.
    gamma = jnp.ones((C,), dtype=jnp.float32)
    beta = jnp.zeros((C,), dtype=jnp.float32)

    def ref_fn(xx, g, b):
        mean = jnp.mean(xx, axis=(0, 2, 3), keepdims=True)
        var = jnp.mean((xx - mean) ** 2, axis=(0, 2, 3), keepdims=True)
        y = ((xx - mean) / jnp.sqrt(var + EPS) * g.reshape(1, -1, 1, 1)
             + b.reshape(1, -1, 1, 1))
        return jnp.maximum(y, 0.0)

    # Small shape -> fully VMEM-resident single-read path.
    out = jax.block_until_ready(bn_relu(x, gamma, beta))
    assert jnp.allclose(out, ref_fn(x, gamma, beta), atol=1e-5, rtol=1e-5), \
        "fused path mismatch vs reference"

    # Also exercise the streaming two-pass path, including the ragged-S tail
    # mask (14*14 = 196 is not a multiple of 128) and a non-trivial affine.
    x2 = jax.random.normal(jax.random.PRNGKey(1), (2, C, 14, 14), jnp.float32)
    gamma2 = jnp.linspace(0.5, 1.5, C, dtype=jnp.float32)
    beta2 = jnp.linspace(-0.2, 0.3, C, dtype=jnp.float32)
    out2 = jax.block_until_ready(bn_relu(x2, gamma2, beta2, force_streaming=True))
    assert jnp.allclose(out2, ref_fn(x2, gamma2, beta2), atol=1e-5, rtol=1e-5), \
        "streaming path mismatch vs reference"

    print("KERNEL_OK")
</pallas_src>

<mosaic_0001>
module attributes {stable_mosaic.version = 11 : i64} {
  func.func @kernel(%arg0: i32, %arg1: memref<2x4x256xf32, #tpu.memory_space<vmem>>, %arg2: memref<1x4x1xf32, #tpu.memory_space<vmem>>, %arg3: memref<1x4x1xf32, #tpu.memory_space<vmem>>, %arg4: memref<2x4x256xf32, #tpu.memory_space<vmem>>) attributes {dimension_semantics = [#tpu.dimension_semantics<arbitrary>], iteration_bounds = array<i64: 1>, scalar_prefetch = 0 : i64, scratch_operands = 0 : i64, tpu.core_type = #tpu.core_type<tc>, window_params = [{pipeline_mode = #tpu.pipeline_mode<synchronous>, transform_indices = @transform_0, window_bounds = array<i64: 2, 4, 256>}, {pipeline_mode = #tpu.pipeline_mode<synchronous>, transform_indices = @transform_1, window_bounds = array<i64: 1, 4, 1>}, {pipeline_mode = #tpu.pipeline_mode<synchronous>, transform_indices = @transform_2, window_bounds = array<i64: 1, 4, 1>}, {pipeline_mode = #tpu.pipeline_mode<synchronous>, transform_indices = @transform_3, window_bounds = array<i64: 2, 4, 256>}]} {
    %c0 = arith.constant 0 : index
    %c0_0 = arith.constant 0 : index
    %c0_1 = arith.constant 0 : index
    %0 = vector.load %arg1[%c0, %c0_0, %c0_1] : memref<2x4x256xf32, #tpu.memory_space<vmem>>, vector<2x4x256xf32>
    %cst = arith.constant dense<0.000000e+00> : vector<2x4xf32>
    %1 = vector.multi_reduction <add>, %0, %cst [2] : vector<2x4x256xf32> to vector<2x4xf32>
    %2 = vector.shape_cast %1 : vector<2x4xf32> to vector<2x4x1xf32>
    %3 = vector.extract_strided_slice %2 {offsets = [0, 0, 0], sizes = [1, 4, 1], strides = [1, 1, 1]} : vector<2x4x1xf32> to vector<1x4x1xf32>
    %4 = vector.extract_strided_slice %2 {offsets = [1, 0, 0], sizes = [1, 4, 1], strides = [1, 1, 1]} : vector<2x4x1xf32> to vector<1x4x1xf32>
    %5 = arith.addf %3, %4 : vector<1x4x1xf32>
    %cst_2 = arith.constant 5.120000e+02 : f32
    %6 = vector.broadcast %cst_2 : f32 to vector<1x4x1xf32>
    %7 = arith.divf %5, %6 : vector<1x4x1xf32>
    %8 = vector.broadcast %7 : vector<1x4x1xf32> to vector<2x4x256xf32>
    %9 = arith.subf %0, %8 : vector<2x4x256xf32>
    %10 = arith.mulf %9, %9 : vector<2x4x256xf32>
    %cst_3 = arith.constant dense<0.000000e+00> : vector<2x4xf32>
    %11 = vector.multi_reduction <add>, %10, %cst_3 [2] : vector<2x4x256xf32> to vector<2x4xf32>
    %12 = vector.shape_cast %11 : vector<2x4xf32> to vector<2x4x1xf32>
    %13 = vector.extract_strided_slice %12 {offsets = [0, 0, 0], sizes = [1, 4, 1], strides = [1, 1, 1]} : vector<2x4x1xf32> to vector<1x4x1xf32>
    %14 = vector.extract_strided_slice %12 {offsets = [1, 0, 0], sizes = [1, 4, 1], strides = [1, 1, 1]} : vector<2x4x1xf32> to vector<1x4x1xf32>
    %15 = arith.addf %13, %14 : vector<1x4x1xf32>
    %cst_4 = arith.constant 5.120000e+02 : f32
    %16 = vector.broadcast %cst_4 : f32 to vector<1x4x1xf32>
    %17 = arith.divf %15, %16 : vector<1x4x1xf32>
    %cst_5 = arith.constant 9.99999974E-6 : f32
    %18 = vector.broadcast %cst_5 : f32 to vector<1x4x1xf32>
    %19 = arith.addf %17, %18 : vector<1x4x1xf32>
    %20 = math.rsqrt %19 : vector<1x4x1xf32>
    %c0_6 = arith.constant 0 : index
    %c0_7 = arith.constant 0 : index
    %c0_8 = arith.constant 0 : index
    %21 = vector.load %arg2[%c0_6, %c0_7, %c0_8] : memref<1x4x1xf32, #tpu.memory_space<vmem>>, vector<1x4x1xf32>
    %22 = arith.mulf %21, %20 : vector<1x4x1xf32>
    %c0_9 = arith.constant 0 : index
    %c0_10 = arith.constant 0 : index
    %c0_11 = arith.constant 0 : index
    %23 = vector.load %arg3[%c0_9, %c0_10, %c0_11] : memref<1x4x1xf32, #tpu.memory_space<vmem>>, vector<1x4x1xf32>
    %24 = arith.mulf %7, %22 : vector<1x4x1xf32>
    %25 = arith.subf %23, %24 : vector<1x4x1xf32>
    %26 = vector.broadcast %22 : vector<1x4x1xf32> to vector<2x4x256xf32>
    %27 = arith.mulf %0, %26 : vector<2x4x256xf32>
    %28 = vector.broadcast %25 : vector<1x4x1xf32> to vector<2x4x256xf32>
    %29 = arith.addf %27, %28 : vector<2x4x256xf32>
    %cst_12 = arith.constant 0.000000e+00 : f32
    %30 = vector.broadcast %cst_12 : f32 to vector<2x4x256xf32>
    %31 = arith.maximumf %29, %30 : vector<2x4x256xf32>
    %c0_13 = arith.constant 0 : index
    %c0_14 = arith.constant 0 : index
    %c0_15 = arith.constant 0 : index
    %32 = vector.load %arg4[%c0_13, %c0_14, %c0_15] : memref<2x4x256xf32, #tpu.memory_space<vmem>>, vector<2x4x256xf32>
    tpu.vector_store %arg4[%c0_13, %c0_14, %c0_15], %31 {strides = array<i32>} : memref<2x4x256xf32, #tpu.memory_space<vmem>>, vector<2x4x256xf32>,
    return
  }
  func.func @transform_0(%arg0: i32) -> (i32, i32, i32) {
    %c0_i32 = arith.constant 0 : i32
    %c0_i32_0 = arith.constant 0 : i32
    %c0_i32_1 = arith.constant 0 : i32
    %c0_i32_2 = arith.constant 0 : i32
    return %c0_i32, %c0_i32_0, %c0_i32_1 : i32, i32, i32
  }
  func.func @transform_1(%arg0: i32) -> (i32, i32, i32) {
    %c0_i32 = arith.constant 0 : i32
    %c0_i32_0 = arith.constant 0 : i32
    %c0_i32_1 = arith.constant 0 : i32
    %c0_i32_2 = arith.constant 0 : i32
    return %c0_i32, %c0_i32_0, %c0_i32_1 : i32, i32, i32
  }
  func.func @transform_2(%arg0: i32) -> (i32, i32, i32) {
    %c0_i32 = arith.constant 0 : i32
    %c0_i32_0 = arith.constant 0 : i32
    %c0_i32_1 = arith.constant 0 : i32
    %c0_i32_2 = arith.constant 0 : i32
    return %c0_i32, %c0_i32_0, %c0_i32_1 : i32, i32, i32
  }
  func.func @transform_3(%arg0: i32) -> (i32, i32, i32) {
    %c0_i32 = arith.constant 0 : i32
    %c0_i32_0 = arith.constant 0 : i32
    %c0_i32_1 = arith.constant 0 : i32
    %c0_i32_2 = arith.constant 0 : i32
    return %c0_i32, %c0_i32_0, %c0_i32_1 : i32, i32, i32
  }
}

</mosaic_0001>

<llo_original>
// kernel: tpu_custom_call.1
$region0: #{tpu_custom_call.1}
  #allocation0 [shape = 'u32[]', space=smem, size = 0x4, offset = 0x4, fixed_abs, tag = 'smem constant byte address 0x4 - core index']
  #allocation1 [shape = 'u32[144,128]{1,0:T(1,128)}', space=vmem, size = 0x12000, scoped, tag = 'internal scratch']
  %s0 = inlined_call_operand.hbm [shape: f32[2,4,256], index: 0, kind: input, shape index: {}]
  %s1 = inlined_call_operand.vmem [shape: f32[1,4,1], index: 1, kind: input, shape index: {}]
  %s2 = inlined_call_operand.vmem [shape: f32[1,4,1], index: 2, kind: input, shape index: {}]
  %s3 = inlined_call_operand.hbm [shape: f32[2,4,256], index: 3, kind: output, shape index: {}]
  %s4 = sld [smem:[#allocation0]]
  $region26: #{tpu_custom_call.1} parent=0
    _
  %s6 = ssub.s32 1, %s4
  %s7 = scalar_select 0, %s6, %s4
  $region1: #{tpu_custom_call.1} parent=0
    #allocation2 [shape = 'u8[8192]{0}', space=vmem, size = 0x2000, scoped, tag = 'input window, operand 0, single buffered']
    #allocation3 [shape = 's32[1]{0}', space=sflag, size = 0x4, scoped, tag = 'scoped memory for tpu_custom_call.1']
    #allocation4 [shape = 's32[1]{0}', space=sflag, size = 0x4, scoped, tag = 'scoped memory for tpu_custom_call.1']
    #allocation5 [shape = 'u8[8192]{0}', space=vmem, size = 0x2000, scoped, tag = 'output window, operand 0, single buffered']
    %8 = vsyncpa [#allocation3], 0
    %9 = vsyncpa [#allocation4], 0
    // Predicated region
    $region2: #{tpu_custom_call.1} parent=1 // pred_check
      _
    $region3: #{tpu_custom_call.1} parent=1 // pred_check_branch
      %11 = sbr.rel (0) target = $region5
    $region4: #{tpu_custom_call.1} parent=1 // pred_region
      %s13 = ssub.s32 256, 256
      %14 = vsyncadd [#allocation3], %s13
      %s15 = sshll.u32 [#allocation2], 4
      %s16 = int_to_ptr.vmem [resolvable:$true] %s15
      %21 = dma.hbm_to_vmem [thread:$0]  %s0, 256, %s16, [#allocation3], 128, 128, 8
    $region5: #{tpu_custom_call.1} parent=1 // pred_fallthru
      _
    // Predicated region
    $region6: #{tpu_custom_call.1} parent=1 // pred_check
      _
    $region7: #{tpu_custom_call.1} parent=1 // pred_check_branch
      %23 = sbr.rel (0) target = $region9
    $region8: #{tpu_custom_call.1} parent=1 // pred_region
      _
    $region9: #{tpu_custom_call.1} parent=1 // pred_fallthru
      _
    // Predicated region
    $region10: #{tpu_custom_call.1} parent=1 // pred_check
      _
    $region11: #{tpu_custom_call.1} parent=1 // pred_check_branch
      %25 = sbr.rel (0) target = $region13
    $region12: #{tpu_custom_call.1} parent=1 // pred_region
      _
    $region13: #{tpu_custom_call.1} parent=1 // pred_fallthru
      _
    // Predicated region
    $region14: #{tpu_custom_call.1} parent=1 // pred_check
      _
    $region15: #{tpu_custom_call.1} parent=1 // pred_check_branch
      %27 = sbr.rel (0) target = $region17
    $region16: #{tpu_custom_call.1} parent=1 // pred_region
      %28 = dma.done [#allocation3], 256
    $region17: #{tpu_custom_call.1} parent=1 // pred_fallthru
      _
    %v29 = vld [vmem:[#allocation2] sm:$0xff]
    %v30 = vld [vmem:[#allocation2 + $0x8] sm:$0xff]
    %v33 = vcombine.high %v29, %v29
    %v34 = vcombine.high %v30, %v30
    %vm37 = vcmask 1043456
    %v38 = vsel %vm37, %v29, 0.0
    %v39 = vsel %vm37, %v33, 0.0
    %v40 = vadd.f32 %v38, %v39
    %41 = vadd.xlane.f32.xlu0 %v40
    %v42 = vpop.xlane.xlu0 %41
    %v43 = vsel %vm37, %v30, 0.0
    %v44 = vsel %vm37, %v34, 0.0
    %v45 = vadd.f32 %v43, %v44
    %46 = vadd.xlane.f32.xlu0 %v45
    %v47 = vpop.xlane.xlu0 %46
    %v48 = vadd.f32 %v42, %v47
    %v49 = vrcp.pop 512.0
    %v50 = vmul.f32 %v48, %v49
    %v53 = vunpack.c.l.s4 839922192
    %v54 = vunpack.c.0.s8 %v53
    %v55 = vlaneseq
    %v56 = vshrl.u32 %v55, 7
    %v57 = vsub.s32 %v54, %v56
    %v58 = vrot.slane %v50, %v57
    %v60 = vsub.f32 %v29, %v58
    %v61 = vsub.f32 %v30, %v58
    %v62 = vmul.f32 %v60, %v60
    %v63 = vmul.f32 %v61, %v61
    %v66 = vcombine.high %v62, %v62
    %v67 = vcombine.high %v63, %v63
    %v70 = vsel %vm37, %v62, 0.0
    %v71 = vsel %vm37, %v66, 0.0
    %v72 = vadd.f32 %v70, %v71
    %73 = vadd.xlane.f32.xlu0 %v72
    %v74 = vpop.xlane.xlu0 %73
    %v75 = vsel %vm37, %v63, 0.0
    %v76 = vsel %vm37, %v67, 0.0
    %v77 = vadd.f32 %v75, %v76
    %78 = vadd.xlane.f32.xlu0 %v77
    %v79 = vpop.xlane.xlu0 %78
    %v80 = vadd.f32 %v74, %v79
    %v81 = vmul.f32 %v80, %v49
    %v82 = vadd.f32 %v81, 1e-05
    %v83 = vrsqrt.pop %v82
    %v84 = vld [vmem:[%s1] sm:$0xf]
    %v85 = vmul.f32 %v84, %v83
    %v86 = vld [vmem:[%s2] sm:$0xf]
    %v87 = vmul.f32 %v50, %v85
    %v88 = vsub.f32 %v86, %v87
    %90 = vset.pattern.permute.xlu0 0
    %91 = vperm.xlu0 %90, %v85
    %v92 = vpop.permute.xlu0 %91
    %v94 = vunpack.c.l.s4 839922192
    %v95 = vunpack.c.0.s8 %v94
    %v96 = vlaneseq
    %v97 = vshrl.u32 %v96, 7
    %v98 = vsub.s32 %v95, %v97
    %v99 = vrot.slane %v92, %v98
    %v101 = vmul.f32 %v29, %v99
    %v102 = vmul.f32 %v30, %v99
    %104 = vset.pattern.permute.xlu0 0
    %105 = vperm.xlu0 %104, %v88
    %v106 = vpop.permute.xlu0 %105
    %v108 = vunpack.c.l.s4 839922192
    %v109 = vunpack.c.0.s8 %v108
    %v110 = vlaneseq
    %v111 = vshrl.u32 %v110, 7
    %v112 = vsub.s32 %v109, %v111
    %v113 = vrot.slane %v106, %v112
    %v115 = vadd.f32 %v101, %v113
    %v116 = vadd.f32 %v102, %v113
    %v117 = vmax.f32 %v115, 0.0
    %v118 = vmax.f32 %v116, 0.0
    %119 = vst [vmem:[#allocation5] sm:$0xff] %v117
    %120 = vst [vmem:[#allocation5 + $0x8] sm:$0xff] %v118
    // Predicated region
    $region18: #{tpu_custom_call.1} parent=1 // pred_check
      _
    $region19: #{tpu_custom_call.1} parent=1 // pred_check_branch
      %122 = sbr.rel (0) target = $region21
    $region20: #{tpu_custom_call.1} parent=1 // pred_region
      %s124 = ssub.s32 256, 256
      %125 = vsyncadd [#allocation4], %s124
      %s126 = sshll.u32 [#allocation5], 4
      %s127 = int_to_ptr.vmem [resolvable:$true] %s126
      %132 = dma.vmem_to_hbm [thread:$0]  %s127, 256, %s3, [#allocation4], 128, 128, 8
    $region21: #{tpu_custom_call.1} parent=1 // pred_fallthru
      _
    // Predicated region
    $region22: #{tpu_custom_call.1} parent=1 // pred_check
      _
    $region23: #{tpu_custom_call.1} parent=1 // pred_check_branch
      %134 = sbr.rel (0) target = $region25
    $region24: #{tpu_custom_call.1} parent=1 // pred_region
      %135 = dma.done [#allocation4], 256
    $region25: #{tpu_custom_call.1} parent=1 // pred_fallthru
      _
    %136 = vsyncpa [#allocation3], 1
    %137 = vsyncpa [#allocation4], 1

</llo_original>
